<compile_context>
chip_gen: v6e
topology: v6e:2x2x1
jax: 0.10.0
libtpu: 0.0.40
codegen_flags: <defaults>
</compile_context>

<pallas_src>
import functools

import jax
import jax.numpy as jnp
from jax.experimental import pallas as pl
from jax.experimental.pallas import tpu as pltpu

LANE = 128          # padded feature / hidden / class width
W_ROWS = 768        # packed weight slab rows: 128 + 256 + 256 + 128
NEG_BIG = -1e30     # bias for padded class lanes -> exp() == 0 in log_softmax

# ----------------------------- Pallas kernel ------------------------------


def make_cheb_kernel(split_k: bool):
    """split_k=True  -> two K=128 dots summed (v5e, 128-wide MXU).
       split_k=False -> single merged K=256 dot (v6e / v7x, 256-wide MXU)."""

    def cheb_kernel(x_ref, l_ref, w_ref, b_ref, out_ref):
        f32 = jnp.float32
        bf16 = jnp.bfloat16

        x = x_ref[...]            # [N, 128] bf16 (features zero-padded)
        L = l_ref[...]            # [N, N]   bf16

        # Static slices of the packed weight slab (zero-cost views).
        w1 = w_ref[0:128, :]      # first_lin            [128, 128]
        # conv0 / conv1 Chebyshev weights, [T0; T1] stacked [256, 128] each
        wa0 = w_ref[128:256, :]
        wa1 = w_ref[256:384, :]
        wb0 = w_ref[384:512, :]
        wb1 = w_ref[512:640, :]
        w2 = w_ref[640:768, :]    # lin2                 [128, 128]

        b1 = b_ref[0:1, :]        # f32 biases, [1, 128] each
        bc0 = b_ref[1:2, :]
        bc1 = b_ref[2:3, :]
        b2 = b_ref[3:4, :]        # padded class lanes hold -1e30

        # first_lin + ReLU  (dropout is identity in eval mode)
        h = jnp.maximum(jnp.dot(x, w1, preferred_element_type=f32) + b1, 0.0)

        def cheb_layer(h, t0, t1, bias):
            hb = h.astype(bf16)
            lh = jnp.dot(L, hb, preferred_element_type=f32).astype(bf16)
            if split_k:
                # v5e: two K=128 pushes either way; skip the [N,256] concat.
                z = (jnp.dot(hb, t0, preferred_element_type=f32)
                     + jnp.dot(lh, t1, preferred_element_type=f32))
            else:
                # v6e/v7x: 256-wide MXU eats K=256 in one pass.
                zcat = jnp.concatenate([hb, lh], axis=1)          # [N, 256]
                wcat = jnp.concatenate([t0, t1], axis=0)          # [256, 128]
                z = jnp.dot(zcat, wcat, preferred_element_type=f32)
            return jnp.maximum(z + bias, 0.0)

        h = cheb_layer(h, wa0, wa1, bc0)   # ChebConv layer 1 (K=2)
        h = cheb_layer(h, wb0, wb1, bc1)   # ChebConv layer 2 (K=2)

        # lin2 + log_softmax over the (padded) class axis, all in f32.
        logits = jnp.dot(h.astype(bf16), w2, preferred_element_type=f32) + b2
        m = jnp.max(logits, axis=-1, keepdims=True)
        s = logits - m
        lse = jnp.log(jnp.sum(jnp.exp(s), axis=-1, keepdims=True))
        out_ref[...] = s - lse

    return cheb_kernel


# ------------------------------ JAX wrapper -------------------------------


def _pad2(w, rows, cols):
    return jnp.zeros((rows, cols), jnp.float32).at[: w.shape[0], : w.shape[1]].set(w)


def pack_params(params, num_class):
    """Pack all weights into one bf16 slab [768,128] and biases into f32 [8,128].

    Call ONCE (weights are call-invariant); the forward path only consumes the
    packed slabs."""
    w1 = _pad2(params["w1"], LANE, LANE)
    wa = jnp.concatenate(
        [_pad2(params["t0_0"], LANE, LANE), _pad2(params["t1_0"], LANE, LANE)], axis=0)
    wb = jnp.concatenate(
        [_pad2(params["t0_1"], LANE, LANE), _pad2(params["t1_1"], LANE, LANE)], axis=0)
    w2 = _pad2(params["w2"], LANE, LANE)
    w_slab = jnp.concatenate([w1, wa, wb, w2], axis=0).astype(jnp.bfloat16)  # [768,128]

    hidden = params["w1"].shape[1]
    b_slab = jnp.zeros((8, LANE), jnp.float32)
    b_slab = b_slab.at[0, :hidden].set(params["b1"][0])
    b_slab = b_slab.at[1, :hidden].set(params["bc0"][0])
    b_slab = b_slab.at[2, :hidden].set(params["bc1"][0])
    b_slab = b_slab.at[3, :].set(
        jnp.full((LANE,), NEG_BIG, jnp.float32).at[:num_class].set(params["b2"][0]))
    # Invariant: padded hidden lanes of b1/bc0/bc1 stay exactly 0; padded class
    # lanes of b2 stay -1e30 (log_softmax correctness depends on it).
    return w_slab, b_slab


def _use_split_k():
    """128-wide MXU (v5e) -> split K; 256-wide MXU (v6e/v7x) -> merged K."""
    try:
        kind = jax.devices()[0].device_kind.lower()
        return "v5" in kind
    except Exception:  # pragma: no cover
        return False


def _cost_estimate(B, N):
    # Per-graph matmul flops (padded shapes).
    per_graph = 2 * N * LANE * LANE                              # first_lin
    per_graph += 2 * (2 * N * N * LANE + 2 * N * (2 * LANE) * LANE)  # 2 conv layers
    per_graph += 2 * N * LANE * LANE                             # lin2
    transcend = B * (N * LANE + N)                               # exp + log
    bytes_acc = (B * (N * LANE * 2 + N * N * 2 + N * LANE * 4)
                 + W_ROWS * LANE * 2 + 8 * LANE * 4)
    return pl.CostEstimate(flops=B * per_graph,
                           transcendentals=transcend,
                           bytes_accessed=bytes_acc)


def build_cheb_forward(num_nodes, num_class, split_k=None):
    """Returns a jitted forward(x, l_hat, w_slab, b_slab) -> [B, N, num_class]."""
    if split_k is None:
        split_k = _use_split_k()
    kernel = make_cheb_kernel(split_k)
    N = num_nodes
    C = num_class

    @jax.jit
    def forward(x, l_hat, w_slab, b_slab):
        # x: [B, N, F] f32, l_hat: [B, N, N] f32, slabs pre-packed.
        B, _, F_in = x.shape
        x_pad = jnp.pad(x.astype(jnp.bfloat16), ((0, 0), (0, 0), (0, LANE - F_in)))
        l_bf = l_hat.astype(jnp.bfloat16)

        out = pl.pallas_call(
            kernel,
            out_shape=jax.ShapeDtypeStruct((B, N, LANE), jnp.float32),
            grid=(B,),
            in_specs=[
                pl.BlockSpec((None, N, LANE), lambda b: (b, 0, 0)),   # per-graph x
                pl.BlockSpec((None, N, N), lambda b: (b, 0, 0)),      # per-graph L_hat
                pl.BlockSpec((W_ROWS, LANE), lambda b: (0, 0)),       # weights: resident
                pl.BlockSpec((8, LANE), lambda b: (0, 0)),            # biases:  resident
            ],
            out_specs=pl.BlockSpec((None, N, LANE), lambda b: (b, 0, 0)),
            compiler_params=pltpu.CompilerParams(
                dimension_semantics=("parallel",)),                   # megacore on v7x
            cost_estimate=_cost_estimate(B, N),
        )(x_pad, l_bf, w_slab, b_slab)
        # Padded class lanes hold ~-1e30 after log_softmax; slice them off.
        return out[..., :C]

    return forward


# ----------------------- graph / parameter construction --------------------


def build_lhat(edge_index, num_nodes):
    """Dense L_hat = -(D^{-1/2} A D^{-1/2}), matching PyG ChebConv's __norm__
    with sym normalization, edge_weight=None, lambda_max=2.0."""
    row, col = edge_index
    A = jnp.zeros((num_nodes, num_nodes), jnp.float32).at[row, col].add(1.0)
    deg = A.sum(axis=1)
    dinv = jnp.where(deg > 0, deg ** -0.5, 0.0)
    A_norm = dinv[:, None] * A * dinv[None, :]
    return -A_norm


def init_params(key, num_node_features, hidden, num_class):
    ks = jax.random.split(key, 8)
    scale_in = 1.0 / jnp.sqrt(jnp.float32(num_node_features))
    scale_h = 1.0 / jnp.sqrt(jnp.float32(hidden))
    # Weights stored as [in, out] (i.e. already transposed vs torch Linear).
    return {
        "w1": jax.random.normal(ks[0], (num_node_features, hidden), jnp.float32) * scale_in,
        "b1": jnp.zeros((1, hidden), jnp.float32),
        "t0_0": jax.random.normal(ks[1], (hidden, hidden), jnp.float32) * scale_h,
        "t1_0": jax.random.normal(ks[2], (hidden, hidden), jnp.float32) * scale_h,
        "bc0": jnp.zeros((1, hidden), jnp.float32),
        "t0_1": jax.random.normal(ks[3], (hidden, hidden), jnp.float32) * scale_h,
        "t1_1": jax.random.normal(ks[4], (hidden, hidden), jnp.float32) * scale_h,
        "bc1": jnp.zeros((1, hidden), jnp.float32),
        "w2": jax.random.normal(ks[5], (hidden, num_class), jnp.float32) * scale_h,
        "b2": jnp.zeros((1, num_class), jnp.float32),
    }


# --------------------------------- main ------------------------------------

if __name__ == "__main__":
    BATCH = 4            # number of graphs processed per call (grid axis)
    NUM_NODES = 16
    NUM_NODE_FEATURES = 100
    HIDDEN = 16
    NUM_CLASS = 18

    key = jax.random.PRNGKey(0)
    k_x, k_p = jax.random.split(key)

    # node features for a small batch of graphs
    x = jax.random.normal(k_x, (BATCH, NUM_NODES, NUM_NODE_FEATURES), jnp.float32)

    # deterministic ring graph, both directions (2*N edges), shared by the batch
    src = jnp.arange(NUM_NODES, dtype=jnp.int32)
    dst = (src + 1) % NUM_NODES
    edge_index = jnp.stack(
        [jnp.concatenate([src, dst]), jnp.concatenate([dst, src])], axis=0
    )
    # data.edge_weight exists in the module but is never passed to conv();
    # it is unused, so we do not use it here either.
    l_hat_single = build_lhat(edge_index, NUM_NODES)
    l_hat = jnp.broadcast_to(l_hat_single, (BATCH, NUM_NODES, NUM_NODES))

    params = init_params(k_p, NUM_NODE_FEATURES, HIDDEN, NUM_CLASS)

    # One-time weight packing (hoisted out of the per-call path).
    w_slab, b_slab = pack_params(params, NUM_CLASS)
    w_slab, b_slab = jax.block_until_ready((w_slab, b_slab))

    forward = build_cheb_forward(NUM_NODES, NUM_CLASS)

    out = forward(x, l_hat, w_slab, b_slab)
    out = jax.block_until_ready(out)

    assert out.shape == (BATCH, NUM_NODES, NUM_CLASS)
    # log_softmax rows should (exp-)sum to ~1
    assert bool(jnp.all(jnp.abs(jnp.sum(jnp.exp(out), axis=-1) - 1.0) < 1e-4))
    # TODO(synk): dropout is identity (eval mode); training-mode dropout would need pltpu.prng_*.
    # TODO(synk): for N in the thousands, L@h needs a tiled (or CSR scalar-prefetch) path;
    #             dense bf16 L stops fitting v7x VMEM around N~5-6k.
    print("KERNEL_OK")
</pallas_src>

<mosaic_0001>
module attributes {stable_mosaic.version = 11 : i64} {
  func.func @cheb_kernel(%arg0: i32, %arg1: memref<1x16x128xbf16, #tpu.memory_space<vmem>>, %arg2: memref<1x16x16xbf16, #tpu.memory_space<vmem>>, %arg3: memref<768x128xbf16, #tpu.memory_space<vmem>>, %arg4: memref<8x128xf32, #tpu.memory_space<vmem>>, %arg5: memref<1x16x128xf32, #tpu.memory_space<vmem>>) attributes {dimension_semantics = [#tpu.dimension_semantics<parallel>], iteration_bounds = array<i64: 4>, scalar_prefetch = 0 : i64, scratch_operands = 0 : i64, tpu.core_type = #tpu.core_type<tc>, window_params = [{transform_indices = @transform_0, window_bounds = array<i64: 1, 16, 128>}, {transform_indices = @transform_1, window_bounds = array<i64: 1, 16, 16>}, {pipeline_mode = #tpu.pipeline_mode<synchronous>, transform_indices = @transform_2, window_bounds = array<i64: 768, 128>}, {pipeline_mode = #tpu.pipeline_mode<synchronous>, transform_indices = @transform_3, window_bounds = array<i64: 8, 128>}, {transform_indices = @transform_4, window_bounds = array<i64: 1, 16, 128>}]} {
    %c0 = arith.constant 0 : index
    %c0_0 = arith.constant 0 : index
    %c0_1 = arith.constant 0 : index
    %0 = vector.load %arg1[%c0, %c0_0, %c0_1] : memref<1x16x128xbf16, #tpu.memory_space<vmem>>, vector<1x16x128xbf16>
    %1 = vector.shape_cast %0 : vector<1x16x128xbf16> to vector<16x128xbf16>
    %c0_2 = arith.constant 0 : index
    %c0_3 = arith.constant 0 : index
    %c0_4 = arith.constant 0 : index
    %2 = vector.load %arg2[%c0_2, %c0_3, %c0_4] : memref<1x16x16xbf16, #tpu.memory_space<vmem>>, vector<1x16x16xbf16>
    %3 = vector.shape_cast %2 : vector<1x16x16xbf16> to vector<16x16xbf16>
    %c0_5 = arith.constant 0 : index
    %c0_6 = arith.constant 0 : index
    %4 = vector.load %arg3[%c0_5, %c0_6] : memref<768x128xbf16, #tpu.memory_space<vmem>>, vector<128x128xbf16>
    %c128 = arith.constant 128 : index
    %c0_7 = arith.constant 0 : index
    %5 = vector.load %arg3[%c128, %c0_7] : memref<768x128xbf16, #tpu.memory_space<vmem>>, vector<128x128xbf16>
    %c256 = arith.constant 256 : index
    %c0_8 = arith.constant 0 : index
    %6 = vector.load %arg3[%c256, %c0_8] : memref<768x128xbf16, #tpu.memory_space<vmem>>, vector<128x128xbf16>
    %c384 = arith.constant 384 : index
    %c0_9 = arith.constant 0 : index
    %7 = vector.load %arg3[%c384, %c0_9] : memref<768x128xbf16, #tpu.memory_space<vmem>>, vector<128x128xbf16>
    %c512 = arith.constant 512 : index
    %c0_10 = arith.constant 0 : index
    %8 = vector.load %arg3[%c512, %c0_10] : memref<768x128xbf16, #tpu.memory_space<vmem>>, vector<128x128xbf16>
    %c640 = arith.constant 640 : index
    %c0_11 = arith.constant 0 : index
    %9 = vector.load %arg3[%c640, %c0_11] : memref<768x128xbf16, #tpu.memory_space<vmem>>, vector<128x128xbf16>
    %c0_12 = arith.constant 0 : index
    %c0_13 = arith.constant 0 : index
    %10 = vector.load %arg4[%c0_12, %c0_13] : memref<8x128xf32, #tpu.memory_space<vmem>>, vector<1x128xf32>
    %c1 = arith.constant 1 : index
    %c0_14 = arith.constant 0 : index
    %11 = vector.load %arg4[%c1, %c0_14] : memref<8x128xf32, #tpu.memory_space<vmem>>, vector<1x128xf32>
    %c2 = arith.constant 2 : index
    %c0_15 = arith.constant 0 : index
    %12 = vector.load %arg4[%c2, %c0_15] : memref<8x128xf32, #tpu.memory_space<vmem>>, vector<1x128xf32>
    %c3 = arith.constant 3 : index
    %c0_16 = arith.constant 0 : index
    %13 = vector.load %arg4[%c3, %c0_16] : memref<8x128xf32, #tpu.memory_space<vmem>>, vector<1x128xf32>
    %cst = arith.constant dense<0.000000e+00> : vector<16x128xf32>
    %14 = tpu.matmul %1, %4, %cst {dimension_numbers = #tpu.dot_dimension_numbers<[1], [0], [0], [1], [0, 0, 1, 1], [], []>} : vector<16x128xbf16>, vector<128x128xbf16>, vector<16x128xf32> -> vector<16x128xf32>
    %15 = vector.broadcast %10 : vector<1x128xf32> to vector<16x128xf32>
    %16 = arith.addf %14, %15 : vector<16x128xf32>
    %cst_17 = arith.constant 0.000000e+00 : f32
    %17 = vector.broadcast %cst_17 : f32 to vector<16x128xf32>
    %18 = arith.maximumf %16, %17 : vector<16x128xf32>
    %19 = arith.truncf %18 : vector<16x128xf32> to vector<16x128xbf16>
    %cst_18 = arith.constant dense<0.000000e+00> : vector<16x128xf32>
    %20 = tpu.matmul %3, %19, %cst_18 {dimension_numbers = #tpu.dot_dimension_numbers<[1], [0], [0], [1], [0, 0, 1, 1], [], []>} : vector<16x16xbf16>, vector<16x128xbf16>, vector<16x128xf32> -> vector<16x128xf32>
    %21 = arith.truncf %20 : vector<16x128xf32> to vector<16x128xbf16>
    %22 = tpu.concatenate %19, %21 in 1 : vector<16x128xbf16>, vector<16x128xbf16> -> vector<16x256xbf16>
    %23 = tpu.concatenate %5, %6 in 0 : vector<128x128xbf16>, vector<128x128xbf16> -> vector<256x128xbf16>
    %cst_19 = arith.constant dense<0.000000e+00> : vector<16x128xf32>
    %24 = tpu.matmul %22, %23, %cst_19 {dimension_numbers = #tpu.dot_dimension_numbers<[1], [0], [0], [1], [0, 0, 1, 1], [], []>} : vector<16x256xbf16>, vector<256x128xbf16>, vector<16x128xf32> -> vector<16x128xf32>
    %25 = vector.broadcast %11 : vector<1x128xf32> to vector<16x128xf32>
    %26 = arith.addf %24, %25 : vector<16x128xf32>
    %cst_20 = arith.constant 0.000000e+00 : f32
    %27 = vector.broadcast %cst_20 : f32 to vector<16x128xf32>
    %28 = arith.maximumf %26, %27 : vector<16x128xf32>
    %29 = arith.truncf %28 : vector<16x128xf32> to vector<16x128xbf16>
    %cst_21 = arith.constant dense<0.000000e+00> : vector<16x128xf32>
    %30 = tpu.matmul %3, %29, %cst_21 {dimension_numbers = #tpu.dot_dimension_numbers<[1], [0], [0], [1], [0, 0, 1, 1], [], []>} : vector<16x16xbf16>, vector<16x128xbf16>, vector<16x128xf32> -> vector<16x128xf32>
    %31 = arith.truncf %30 : vector<16x128xf32> to vector<16x128xbf16>
    %32 = tpu.concatenate %29, %31 in 1 : vector<16x128xbf16>, vector<16x128xbf16> -> vector<16x256xbf16>
    %33 = tpu.concatenate %7, %8 in 0 : vector<128x128xbf16>, vector<128x128xbf16> -> vector<256x128xbf16>
    %cst_22 = arith.constant dense<0.000000e+00> : vector<16x128xf32>
    %34 = tpu.matmul %32, %33, %cst_22 {dimension_numbers = #tpu.dot_dimension_numbers<[1], [0], [0], [1], [0, 0, 1, 1], [], []>} : vector<16x256xbf16>, vector<256x128xbf16>, vector<16x128xf32> -> vector<16x128xf32>
    %35 = vector.broadcast %12 : vector<1x128xf32> to vector<16x128xf32>
    %36 = arith.addf %34, %35 : vector<16x128xf32>
    %cst_23 = arith.constant 0.000000e+00 : f32
    %37 = vector.broadcast %cst_23 : f32 to vector<16x128xf32>
    %38 = arith.maximumf %36, %37 : vector<16x128xf32>
    %39 = arith.truncf %38 : vector<16x128xf32> to vector<16x128xbf16>
    %cst_24 = arith.constant dense<0.000000e+00> : vector<16x128xf32>
    %40 = tpu.matmul %39, %9, %cst_24 {dimension_numbers = #tpu.dot_dimension_numbers<[1], [0], [0], [1], [0, 0, 1, 1], [], []>} : vector<16x128xbf16>, vector<128x128xbf16>, vector<16x128xf32> -> vector<16x128xf32>
    %41 = vector.broadcast %13 : vector<1x128xf32> to vector<16x128xf32>
    %42 = arith.addf %40, %41 : vector<16x128xf32>
    %cst_25 = arith.constant dense<0xFF800000> : vector<16xf32>
    %43 = vector.multi_reduction <maximumf>, %42, %cst_25 [1] : vector<16x128xf32> to vector<16xf32>
    %44 = vector.shape_cast %43 : vector<16xf32> to vector<16x1xf32>
    %45 = vector.broadcast %44 : vector<16x1xf32> to vector<16x128xf32>
    %46 = arith.subf %42, %45 : vector<16x128xf32>
    %47 = math.exp %46 : vector<16x128xf32>
    %cst_26 = arith.constant dense<0.000000e+00> : vector<16xf32>
    %48 = vector.multi_reduction <add>, %47, %cst_26 [1] : vector<16x128xf32> to vector<16xf32>
    %49 = vector.shape_cast %48 : vector<16xf32> to vector<16x1xf32>
    %50 = math.log %49 : vector<16x1xf32>
    %51 = vector.broadcast %50 : vector<16x1xf32> to vector<16x128xf32>
    %52 = arith.subf %46, %51 : vector<16x128xf32>
    %c0_27 = arith.constant 0 : index
    %c0_28 = arith.constant 0 : index
    %c0_29 = arith.constant 0 : index
    %53 = vector.load %arg5[%c0_27, %c0_28, %c0_29] : memref<1x16x128xf32, #tpu.memory_space<vmem>>, vector<1x16x128xf32>
    %54 = vector.shape_cast %53 : vector<1x16x128xf32> to vector<16x128xf32>
    %55 = vector.shape_cast %52 : vector<16x128xf32> to vector<1x16x128xf32>
    tpu.vector_store %arg5[%c0_27, %c0_28, %c0_29], %55 {strides = array<i32>} : memref<1x16x128xf32, #tpu.memory_space<vmem>>, vector<1x16x128xf32>,
    return
  }
  func.func @transform_0(%arg0: i32) -> (i32, i32, i32) {
    %c0_i32 = arith.constant 0 : i32
    %c0_i32_0 = arith.constant 0 : i32
    %c0_i32_1 = arith.constant 0 : i32
    return %arg0, %c0_i32, %c0_i32_0 : i32, i32, i32
  }
  func.func @transform_1(%arg0: i32) -> (i32, i32, i32) {
    %c0_i32 = arith.constant 0 : i32
    %c0_i32_0 = arith.constant 0 : i32
    %c0_i32_1 = arith.constant 0 : i32
    return %arg0, %c0_i32, %c0_i32_0 : i32, i32, i32
  }
  func.func @transform_2(%arg0: i32) -> (i32, i32) {
    %c0_i32 = arith.constant 0 : i32
    %c0_i32_0 = arith.constant 0 : i32
    %c0_i32_1 = arith.constant 0 : i32
    return %c0_i32, %c0_i32_0 : i32, i32
  }
  func.func @transform_3(%arg0: i32) -> (i32, i32) {
    %c0_i32 = arith.constant 0 : i32
    %c0_i32_0 = arith.constant 0 : i32
    %c0_i32_1 = arith.constant 0 : i32
    return %c0_i32, %c0_i32_0 : i32, i32
  }
  func.func @transform_4(%arg0: i32) -> (i32, i32, i32) {
    %c0_i32 = arith.constant 0 : i32
    %c0_i32_0 = arith.constant 0 : i32
    %c0_i32_1 = arith.constant 0 : i32
    return %arg0, %c0_i32, %c0_i32_0 : i32, i32, i32
  }
}

</mosaic_0001>

<llo_original>
// kernel: forward.1
$region0: #{forward.1}
  #allocation0 [shape = 'u32[]', space=smem, size = 0x4, offset = 0x4, fixed_abs, tag = 'smem constant byte address 0x4 - core index']
  #allocation1 [shape = 'u32[144,128]{1,0:T(1,128)}', space=vmem, size = 0x12000, scoped, tag = 'internal scratch']
  %s0 = inlined_call_operand.vmem [shape: bf16[4,16,128], index: 0, kind: input, shape index: {}]
  %s1 = inlined_call_operand.vmem [shape: bf16[4,16,16], index: 1, kind: input, shape index: {}]
  %s2 = inlined_call_operand.hbm [shape: bf16[768,128], index: 2, kind: input, shape index: {}]
  %s3 = inlined_call_operand.vmem [shape: f32[8,128], index: 3, kind: input, shape index: {}]
  %s4 = inlined_call_operand.hbm [shape: f32[4,16,128], index: 4, kind: output, shape index: {}]
  %s5 = sld [smem:[#allocation0]]
  $region53: #{forward.1} parent=0
    _
  %s7 = ssub.s32 1, %s5
  %s8 = scalar_select 0, %s7, %s5
  $region1: #{forward.1} parent=0
    #allocation2 [shape = 'u8[196608]{0}', space=vmem, size = 0x30000, scoped, tag = 'input window, operand 2, single buffered']
    #allocation3 [shape = 's32[2]{0}', space=sflag, size = 0x8, scoped, tag = 'scoped memory for forward.1']
    #allocation4 [shape = 's32[2]{0}', space=sflag, size = 0x8, scoped, tag = 'scoped memory for forward.1']
    #allocation5 [shape = 'u8[16384]{0}', space=vmem, size = 0x4000, scoped, tag = 'output window, operand 0']
    %9 = vsyncpa [#allocation3], 0
    %10 = vsyncpa [#allocation4], 0
    %s11 = scalar_lea.sflag [#allocation4], 1
    %12 = vsyncpa %s11, 0
    loop: start=0, step=1, limit=6
    $region2: #{forward.1} parent=1 // loop_pre_header
      _
    $region3: #{forward.1} parent=1 // loop_header
      %s14 = sphi 0, %s18
      %p15 = scmp.ge.s32.totalorder %s14, 6
      %s24 = sphi 0, %s26
      %s27 = sphi 0, %s24
      %s28 = sphi 0, %s27
      %s44 = sphi 0, %s28
      %s50 = sphi 0, %s52
      %s53 = sphi 0, %s50
      %s54 = sphi 0, %s53
      %s70 = sphi 0, %s54
      %s74 = sphi 0, %s74
      %s76 = sphi 0, %s74
      %s77 = sphi 0, %s76
      %s91 = sphi 0, %s77
      %s95 = sphi 0, %s95
      %s97 = sphi 0, %s95
      %s98 = sphi 0, %s97
      %s112 = sphi 0, %s98
      %s118 = sphi 0, %s120
      %s121 = sphi 0, %s118
      %s122 = sphi 0, %s121
      %s138 = sphi 0, %s122
    $region4: #{forward.1} parent=1 // loop_header_branch
      %17 = sbr.rel (%p15) target = $region8
    $region5: #{forward.1} parent=1 // loop_body
      %s19 = ssub.s32 %s14, 1
      %s20 = ssub.s32 %s14, 2
      %s21 = sadd.s32 %s14, 1
      %s22 = ssub.s32 %s14, %s21
      %p23 = scmp.eq.s32.totalorder %s22, 0
      %s25 = sadd.s32 %s24, 1
      %s26 = scalar_select %p23, %s24, %s25
      %p29 = pneg %p23
      %p30 = scmp.eq.s32.totalorder %s14, 3
      %p31 = por %p29, %p30
      %p32 = scmp.ne.s32.totalorder %s24, %s27
      %p33 = scmp.eq.s32.totalorder %s14, 0
      %p34 = por %p32, %p33
      %p35 = scmp.ne.s32.totalorder %s24, %s27
      %p36 = scmp.eq.s32.totalorder %s19, 3
      %p37 = por %p35, %p36
      %p38 = scmp.ne.s32.totalorder %s27, %s28
      %p39 = scmp.eq.s32.totalorder %s19, 0
      %p40 = por %p38, %p39
      %p41 = scmp.ne.s32.totalorder %s27, %s28
      %p42 = scmp.eq.s32.totalorder %s20, 3
      %p43 = por %p41, %p42
      %p45 = scmp.ne.s32.totalorder %s28, %s44
      %p46 = scmp.eq.s32.totalorder %s20, 0
      %p47 = por %p45, %p46
      %s48 = ssub.s32 %s14, %s21
      %p49 = scmp.eq.s32.totalorder %s48, 0
      %s51 = sadd.s32 %s50, 1
      %s52 = scalar_select %p49, %s50, %s51
      %p55 = pneg %p49
      %p56 = scmp.eq.s32.totalorder %s14, 3
      %p57 = por %p55, %p56
      %p58 = scmp.ne.s32.totalorder %s50, %s53
      %p59 = scmp.eq.s32.totalorder %s14, 0
      %p60 = por %p58, %p59
      %p61 = scmp.ne.s32.totalorder %s50, %s53
      %p62 = scmp.eq.s32.totalorder %s19, 3
      %p63 = por %p61, %p62
      %p64 = scmp.ne.s32.totalorder %s53, %s54
      %p65 = scmp.eq.s32.totalorder %s19, 0
      %p66 = por %p64, %p65
      %p67 = scmp.ne.s32.totalorder %s53, %s54
      %p68 = scmp.eq.s32.totalorder %s20, 3
      %p69 = por %p67, %p68
      %p71 = scmp.ne.s32.totalorder %s54, %s70
      %p72 = scmp.eq.s32.totalorder %s20, 0
      %p73 = por %p71, %p72
      %s75 = sadd.s32 %s74, 1
      %p78 = scmp.eq.s32.totalorder %s14, 3
      %p79 = scmp.ne.s32.totalorder %s74, %s76
      %p80 = scmp.eq.s32.totalorder %s14, 0
      %p81 = por %p79, %p80
      %p82 = scmp.ne.s32.totalorder %s74, %s76
      %p83 = scmp.eq.s32.totalorder %s19, 3
      %p84 = por %p82, %p83
      %p85 = scmp.ne.s32.totalorder %s76, %s77
      %p86 = scmp.eq.s32.totalorder %s19, 0
      %p87 = por %p85, %p86
      %p88 = scmp.ne.s32.totalorder %s76, %s77
      %p89 = scmp.eq.s32.totalorder %s20, 3
      %p90 = por %p88, %p89
      %p92 = scmp.ne.s32.totalorder %s77, %s91
      %p93 = scmp.eq.s32.totalorder %s20, 0
      %p94 = por %p92, %p93
      %s96 = sadd.s32 %s95, 1
      %p99 = scmp.eq.s32.totalorder %s14, 3
      %p100 = scmp.ne.s32.totalorder %s95, %s97
      %p101 = scmp.eq.s32.totalorder %s14, 0
      %p102 = por %p100, %p101
      %p103 = scmp.ne.s32.totalorder %s95, %s97
      %p104 = scmp.eq.s32.totalorder %s19, 3
      %p105 = por %p103, %p104
      %p106 = scmp.ne.s32.totalorder %s97, %s98
      %p107 = scmp.eq.s32.totalorder %s19, 0
      %p108 = por %p106, %p107
      %p109 = scmp.ne.s32.totalorder %s97, %s98
      %p110 = scmp.eq.s32.totalorder %s20, 3
      %p111 = por %p109, %p110
      %p113 = scmp.ne.s32.totalorder %s98, %s112
      %p114 = scmp.eq.s32.totalorder %s20, 0
      %p115 = por %p113, %p114
      %s116 = ssub.s32 %s14, %s21
      %p117 = scmp.eq.s32.totalorder %s116, 0
      %s119 = sadd.s32 %s118, 1
      %s120 = scalar_select %p117, %s118, %s119
      %p123 = pneg %p117
      %p124 = scmp.eq.s32.totalorder %s14, 3
      %p125 = por %p123, %p124
      %p126 = scmp.ne.s32.totalorder %s118, %s121
      %p127 = scmp.eq.s32.totalorder %s14, 0
      %p128 = por %p126, %p127
      %p129 = scmp.ne.s32.totalorder %s118, %s121
      %p130 = scmp.eq.s32.totalorder %s19, 3
      %p131 = por %p129, %p130
      %p132 = scmp.ne.s32.totalorder %s121, %s122
      %p133 = scmp.eq.s32.totalorder %s19, 0
      %p134 = por %p132, %p133
      %p135 = scmp.ne.s32.totalorder %s121, %s122
      %p136 = scmp.eq.s32.totalorder %s20, 3
      %p137 = por %p135, %p136
      %p139 = scmp.ne.s32.totalorder %s122, %s138
      %p140 = scmp.eq.s32.totalorder %s20, 0
      %p141 = por %p139, %p140
      %p142 = scmp.le.s32.totalorder 1, %s14
      %p143 = scmp.lt.s32.totalorder %s14, 5
      %p144 = pnand %p142, %p143
      %p145 = pneg %p144
      // Predicated region
      $region9: #{forward.1} parent=5 // pred_check
        _
      $region10: #{forward.1} parent=5 // pred_check_branch
        %147 = sbr.rel (%p144) target = $region12
      $region11: #{forward.1} parent=5 // pred_region
        %s148 = ssub.s32 %s14, 1
        // Predicated region
        $region13: #{forward.1} parent=11 // pred_check
          %p149 = pneg %p87
        $region14: #{forward.1} parent=11 // pred_check_branch
          %151 = sbr.rel (%p149) target = $region16
        $region15: #{forward.1} parent=11 // pred_region
          %s153 = ssub.s32 6144, 6144
          %154 = vsyncadd [#allocation3], %s153
          %s155 = sshll.u32 [#allocation2], 4
          %s156 = int_to_ptr.vmem [resolvable:$true] %s155
          %161 = dma.hbm_to_vmem [thread:$0]  %s2, 6144, %s156, [#allocation3], 64, 64, 4
        $region16: #{forward.1} parent=11 // pred_fallthru
          _
        // Predicated region
        $region17: #{forward.1} parent=11 // pred_check
          %p162 = pneg %p108
        $region18: #{forward.1} parent=11 // pred_check_branch
          %164 = sbr.rel (%p162) target = $region20
        $region19: #{forward.1} parent=11 // pred_region
          _
        $region20: #{forward.1} parent=11 // pred_fallthru
          _
      $region12: #{forward.1} parent=5 // pred_fallthru
        _
      %p165 = scmp.lt.s32.totalorder %s14, 4
      // Predicated region
      $region21: #{forward.1} parent=5 // pred_check
        %p166 = pneg %p165
      $region22: #{forward.1} parent=5 // pred_check_branch
        %168 = sbr.rel (%p166) target = $region24
      $region23: #{forward.1} parent=5 // pred_region
        // Predicated region
        $region25: #{forward.1} parent=23 // pred_check
          %p169 = pneg %p34
        $region26: #{forward.1} parent=23 // pred_check_branch
          %171 = sbr.rel (%p169) target = $region28
        $region27: #{forward.1} parent=23 // pred_region
          %p172 = scmp.lt.s32.totalorder %s14, 3
          %s173 = scalar_select %p172, %s14, 3
          %s174 = smul.addr %s173, 2
          %s175 = smul.addr %s174, 4
          %s176 = scalar_lea.vmem %s0, %s175
        $region28: #{forward.1} parent=23 // pred_fallthru
          _
        // Predicated region
        $region29: #{forward.1} parent=23 // pred_check
          %p177 = pneg %p60
        $region30: #{forward.1} parent=23 // pred_check_branch
          %179 = sbr.rel (%p177) target = $region32
        $region31: #{forward.1} parent=23 // pred_region
          %p180 = scmp.lt.s32.totalorder %s14, 3
          %s181 = scalar_select %p180, %s14, 3
          %s182 = smul.addr %s181, 2
          %s183 = smul.addr %s182, 4
          %s184 = scalar_lea.vmem %s1, %s183
        $region32: #{forward.1} parent=23 // pred_fallthru
          _
      $region24: #{forward.1} parent=5 // pred_fallthru
        _
      %p185 = scmp.le.s32.totalorder 1, %s14
      %p186 = scmp.lt.s32.totalorder %s14, 5
      %p187 = pnand %p185, %p186
      %p188 = pneg %p187
      // Predicated region
      $region33: #{forward.1} parent=5 // pred_check
        _
      $region34: #{forward.1} parent=5 // pred_check_branch
        %190 = sbr.rel (%p187) target = $region36
      $region35: #{forward.1} parent=5 // pred_region
        %s191 = ssub.s32 %s14, 1
        // Predicated region
        $region37: #{forward.1} parent=35 // pred_check
          %p192 = pneg %p87
        $region38: #{forward.1} parent=35 // pred_check_branch
          %194 = sbr.rel (%p192) target = $region40
        $region39: #{forward.1} parent=35 // pred_region
          %195 = dma.done [#allocation3], 6144
        $region40: #{forward.1} parent=35 // pred_fallthru
          _
        %p196 = scmp.lt.s32.totalorder %s19, 3
        %s197 = scalar_select %p196, %s19, 3
        %s198 = smul.addr %s197, 2
        %s199 = smul.addr %s198, 4
        %s200 = scalar_lea.vmem %s0, %s199
        %p201 = pneg %p40
        %p202 = pneg %p37
        %p203 = scmp.lt.s32.totalorder %s19, 3
        %s204 = scalar_select %p203, %s19, 3
        %s205 = smul.addr %s204, 2
        %s206 = smul.addr %s205, 4
        %s207 = scalar_lea.vmem %s1, %s206
        %p208 = pneg %p66
        %p209 = pneg %p63
        %p210 = pneg %p87
        %p211 = pneg %p84
        %p212 = pneg %p108
        %p213 = pneg %p105
        %p214 = pneg %p134
        %p215 = pneg %p131
        %s216 = sand.u32 %s121, 1
        %s217 = scalar_lea.sflag [#allocation4], %s216
        %s218 = sand.u32 %s121, 1
        %s219 = smul.addr %s218, 16
        %s220 = scalar_lea.vmem [#allocation5], %s219
        %p221 = scmp.lt.s32.totalorder %s19, 3
        %s222 = scalar_select %p221, %s19, 3
        %s223 = smul.addr %s222, 2
        %s224 = smul.addr %s223, 4
        %s225 = scalar_lea.vmem %s0, %s224
        %p226 = scmp.lt.s32.totalorder %s19, 3
        %s227 = scalar_select %p226, %s19, 3
        %s228 = smul.addr %s227, 2
        %s229 = smul.addr %s228, 4
        %s230 = scalar_lea.vmem %s1, %s229
        %v232 = vld [vmem:[%s225] sm:$0xf]
        %v233 = vld [vmem:[%s225 + $0x4] sm:$0xf]
        %v234 = vld [vmem:[%s230] sm:$0xf]
        %v235 = vld [vmem:[%s230 + $0x4] sm:$0xf]
        %v236 = vld [vmem:[#allocation2] sm:$0xf]
        %v237 = vld [vmem:[#allocation2 + $0x4] sm:$0xf]
        %v238 = vld [vmem:[#allocation2 + $0x8] sm:$0xf]
        %v239 = vld [vmem:[#allocation2 + $0xc] sm:$0xf]
        %v240 = vld [vmem:[#allocation2 + $0x10] sm:$0xf]
        %v241 = vld [vmem:[#allocation2 + $0x14] sm:$0xf]
        %v242 = vld [vmem:[#allocation2 + $0x18] sm:$0xf]
        %v243 = vld [vmem:[#allocation2 + $0x1c] sm:$0xf]
        %v244 = vld [vmem:[#allocation2 + $0x20] sm:$0xf]
        %v245 = vld [vmem:[#allocation2 + $0x24] sm:$0xf]
        %v246 = vld [vmem:[#allocation2 + $0x28] sm:$0xf]
        %v247 = vld [vmem:[#allocation2 + $0x2c] sm:$0xf]
        %v248 = vld [vmem:[#allocation2 + $0x30] sm:$0xf]
        %v249 = vld [vmem:[#allocation2 + $0x34] sm:$0xf]
        %v250 = vld [vmem:[#allocation2 + $0x38] sm:$0xf]
        %v251 = vld [vmem:[#allocation2 + $0x3c] sm:$0xf]
        %v252 = vld [vmem:[#allocation2 + $0x40] sm:$0xf]
        %v253 = vld [vmem:[#allocation2 + $0x44] sm:$0xf]
        %v254 = vld [vmem:[#allocation2 + $0x48] sm:$0xf]
        %v255 = vld [vmem:[#allocation2 + $0x4c] sm:$0xf]
        %v256 = vld [vmem:[#allocation2 + $0x50] sm:$0xf]
        %v257 = vld [vmem:[#allocation2 + $0x54] sm:$0xf]
        %v258 = vld [vmem:[#allocation2 + $0x58] sm:$0xf]
        %v259 = vld [vmem:[#allocation2 + $0x5c] sm:$0xf]
        %v260 = vld [vmem:[#allocation2 + $0x60] sm:$0xf]
        %v261 = vld [vmem:[#allocation2 + $0x64] sm:$0xf]
        %v262 = vld [vmem:[#allocation2 + $0x68] sm:$0xf]
        %v263 = vld [vmem:[#allocation2 + $0x6c] sm:$0xf]
        %v264 = vld [vmem:[#allocation2 + $0x70] sm:$0xf]
        %v265 = vld [vmem:[#allocation2 + $0x74] sm:$0xf]
        %v266 = vld [vmem:[#allocation2 + $0x78] sm:$0xf]
        %v267 = vld [vmem:[#allocation2 + $0x7c] sm:$0xf]
        %v268 = vld [vmem:[#allocation2 + $0x80] sm:$0xf]
        %v269 = vld [vmem:[#allocation2 + $0x84] sm:$0xf]
        %v270 = vld [vmem:[#allocation2 + $0x88] sm:$0xf]
        %v271 = vld [vmem:[#allocation2 + $0x8c] sm:$0xf]
        %v272 = vld [vmem:[#allocation2 + $0x90] sm:$0xf]
        %v273 = vld [vmem:[#allocation2 + $0x94] sm:$0xf]
        %v274 = vld [vmem:[#allocation2 + $0x98] sm:$0xf]
        %v275 = vld [vmem:[#allocation2 + $0x9c] sm:$0xf]
        %v276 = vld [vmem:[#allocation2 + $0xa0] sm:$0xf]
        %v277 = vld [vmem:[#allocation2 + $0xa4] sm:$0xf]
        %v278 = vld [vmem:[#allocation2 + $0xa8] sm:$0xf]
        %v279 = vld [vmem:[#allocation2 + $0xac] sm:$0xf]
        %v280 = vld [vmem:[#allocation2 + $0xb0] sm:$0xf]
        %v281 = vld [vmem:[#allocation2 + $0xb4] sm:$0xf]
        %v282 = vld [vmem:[#allocation2 + $0xb8] sm:$0xf]
        %v283 = vld [vmem:[#allocation2 + $0xbc] sm:$0xf]
        %v284 = vld [vmem:[#allocation2 + $0xc0] sm:$0xf]
        %v285 = vld [vmem:[#allocation2 + $0xc4] sm:$0xf]
        %v286 = vld [vmem:[#allocation2 + $0xc8] sm:$0xf]
        %v287 = vld [vmem:[#allocation2 + $0xcc] sm:$0xf]
        %v288 = vld [vmem:[#allocation2 + $0xd0] sm:$0xf]
        %v289 = vld [vmem:[#allocation2 + $0xd4] sm:$0xf]
        %v290 = vld [vmem:[#allocation2 + $0xd8] sm:$0xf]
        %v291 = vld [vmem:[#allocation2 + $0xdc] sm:$0xf]
        %v292 = vld [vmem:[#allocation2 + $0xe0] sm:$0xf]
        %v293 = vld [vmem:[#allocation2 + $0xe4] sm:$0xf]
        %v294 = vld [vmem:[#allocation2 + $0xe8] sm:$0xf]
        %v295 = vld [vmem:[#allocation2 + $0xec] sm:$0xf]
        %v296 = vld [vmem:[#allocation2 + $0xf0] sm:$0xf]
        %v297 = vld [vmem:[#allocation2 + $0xf4] sm:$0xf]
        %v298 = vld [vmem:[#allocation2 + $0xf8] sm:$0xf]
        %v299 = vld [vmem:[#allocation2 + $0xfc] sm:$0xf]
        %v300 = vld [vmem:[#allocation2 + $0x100] sm:$0xf]
        %v301 = vld [vmem:[#allocation2 + $0x104] sm:$0xf]
        %v302 = vld [vmem:[#allocation2 + $0x108] sm:$0xf]
        %v303 = vld [vmem:[#allocation2 + $0x10c] sm:$0xf]
        %v304 = vld [vmem:[#allocation2 + $0x110] sm:$0xf]
        %v305 = vld [vmem:[#allocation2 + $0x114] sm:$0xf]
        %v306 = vld [vmem:[#allocation2 + $0x118] sm:$0xf]
        %v307 = vld [vmem:[#allocation2 + $0x11c] sm:$0xf]
        %v308 = vld [vmem:[#allocation2 + $0x120] sm:$0xf]
        %v309 = vld [vmem:[#allocation2 + $0x124] sm:$0xf]
        %v310 = vld [vmem:[#allocation2 + $0x128] sm:$0xf]
        %v311 = vld [vmem:[#allocation2 + $0x12c] sm:$0xf]
        %v312 = vld [vmem:[#allocation2 + $0x130] sm:$0xf]
        %v313 = vld [vmem:[#allocation2 + $0x134] sm:$0xf]
        %v314 = vld [vmem:[#allocation2 + $0x138] sm:$0xf]
        %v315 = vld [vmem:[#allocation2 + $0x13c] sm:$0xf]
        %v316 = vld [vmem:[#allocation2 + $0x140] sm:$0xf]
        %v317 = vld [vmem:[#allocation2 + $0x144] sm:$0xf]
        %v318 = vld [vmem:[#allocation2 + $0x148] sm:$0xf]
        %v319 = vld [vmem:[#allocation2 + $0x14c] sm:$0xf]
        %v320 = vld [vmem:[#allocation2 + $0x150] sm:$0xf]
        %v321 = vld [vmem:[#allocation2 + $0x154] sm:$0xf]
        %v322 = vld [vmem:[#allocation2 + $0x158] sm:$0xf]
        %v323 = vld [vmem:[#allocation2 + $0x15c] sm:$0xf]
        %v324 = vld [vmem:[#allocation2 + $0x160] sm:$0xf]
        %v325 = vld [vmem:[#allocation2 + $0x164] sm:$0xf]
        %v326 = vld [vmem:[#allocation2 + $0x168] sm:$0xf]
        %v327 = vld [vmem:[#allocation2 + $0x16c] sm:$0xf]
        %v328 = vld [vmem:[#allocation2 + $0x170] sm:$0xf]
        %v329 = vld [vmem:[#allocation2 + $0x174] sm:$0xf]
        %v330 = vld [vmem:[#allocation2 + $0x178] sm:$0xf]
        %v331 = vld [vmem:[#allocation2 + $0x17c] sm:$0xf]
        %v332 = vld [vmem:[%s3] sm:$0x1]
        %v333 = vld [vmem:[%s3 + $0x1] sm:$0x1]
        %v334 = vld [vmem:[%s3 + $0x2] sm:$0x1]
        %v335 = vld [vmem:[%s3 + $0x3] sm:$0x1]
        %v336 = vlaneseq
        %v337 = vshrl.u32 %v336, 7
        %v338 = vsub.s32 0, %v337
        %v339 = vrot.slane %v332, %v338
        %v342 = vunpack.c.l.b16 %v232
        %v343 = vunpack.c.l.b16 %v233
        %v344 = vpack.c.b16 %v343, %v342
        %v362 = vunpack.c.l.b16 %v236
        %v363 = vunpack.c.l.b16 %v237
        %v364 = vunpack.c.l.b16 %v238
        %v365 = vunpack.c.l.b16 %v239
        %v366 = vunpack.c.l.b16 %v240
        %v367 = vunpack.c.l.b16 %v241
        %v368 = vunpack.c.l.b16 %v242
        %v369 = vunpack.c.l.b16 %v243
        %v370 = vunpack.c.l.b16 %v244
        %v371 = vunpack.c.l.b16 %v245
        %v372 = vunpack.c.l.b16 %v246
        %v373 = vunpack.c.l.b16 %v247
        %v374 = vunpack.c.l.b16 %v248
        %v375 = vunpack.c.l.b16 %v249
        %v376 = vunpack.c.l.b16 %v250
        %v377 = vunpack.c.l.b16 %v251
        %v378 = vpack.c.b16 %v363, %v362
        %v379 = vpack.c.b16 %v365, %v364
        %v380 = vpack.c.b16 %v367, %v366
        %v381 = vpack.c.b16 %v369, %v368
        %v382 = vpack.c.b16 %v371, %v370
        %v383 = vpack.c.b16 %v373, %v372
        %v384 = vpack.c.b16 %v375, %v374
        %v385 = vpack.c.b16 %v377, %v376
        %394 = vmatprep.subr.bf16.mxu0 0
        %395 = vmatpush1.bf16.msra.mxu0 %v385
        %396 = vmatprep.subr.bf16.mxu0 0
        %397 = vmatpush1.bf16.msra.mxu0 %v384
        %398 = vmatprep.subr.bf16.mxu0 0
        %399 = vmatpush1.bf16.msra.mxu0 %v383
        %400 = vmatprep.subr.bf16.mxu0 0
        %401 = vmatpush1.bf16.msra.mxu0 %v382
        %402 = vmatprep.subr.bf16.mxu0 0
        %403 = vmatpush1.bf16.msra.mxu0 %v381
        %404 = vmatprep.subr.bf16.mxu0 0
        %405 = vmatpush1.bf16.msra.mxu0 %v380
        %406 = vmatprep.subr.bf16.mxu0 0
        %407 = vmatpush1.bf16.msra.mxu0 %v379
        %408 = vmatprep.subr.bf16.mxu0 0
        %409 = vmatpush1.bf16.msra.mxu0 %v378
        %410 = vmatprep.subr.bf16.mxu0 0
        %411 = vmatpush2.bf16.msra.mxu0 0
        %412 = vmatprep.subr.bf16.mxu0 0
        %413 = vmatpush2.bf16.msra.mxu0 0
        %414 = vmatprep.subr.bf16.mxu0 0
        %415 = vmatpush2.bf16.msra.mxu0 0
        %416 = vmatprep.subr.bf16.mxu0 0
        %417 = vmatpush2.bf16.msra.mxu0 0
        %418 = vmatprep.subr.bf16.mxu0 0
        %419 = vmatpush2.bf16.msra.mxu0 0
        %420 = vmatprep.subr.bf16.mxu0 0
        %421 = vmatpush2.bf16.msra.mxu0 0
        %422 = vmatprep.subr.bf16.mxu0 0
        %423 = vmatpush2.bf16.msra.mxu0 0
        %424 = vmatprep.subr.bf16.mxu0 0
        %425 = vmatpush2.bf16.msra.mxu0 0
        %426 = vmatprep.mubr.bf16.mxu0 0
        %427 = vmatmul.mubr.bf16.gmra.mxu0 %v344
        %v428 = vpop.f32.mrf.mxu0
        %v429 = vadd.f32 %v339, %v428
        %v430 = vpop.f32.mrf.mxu0
        %v431 = vpop.f32.mrf.mxu0
        %v432 = vadd.f32 %v339, %v431
        %v433 = vpop.f32.mrf.mxu0
        %434 = vdwg.mxu0
        %v435 = vmax.f32 %v429, 0.0
        %v436 = vmax.f32 %v432, 0.0
        %v437 = vpack.c.bf16 %v436, %v435
        %v440 = vunpack.c.l.b16 %v234
        %v441 = vunpack.c.l.b16 %v235
        %v442 = vpack.c.b16 %v441, %v440
        %vm443 = vcmask 130048
        %v445 = vsel %vm443, %v442, 0
        %447 = vmatprep.subr.bf16.mxu0 0
        %448 = vmatpush1.bf16.msra.mxu0 0
        %449 = vmatprep.subr.bf16.mxu0 0
        %450 = vmatpush1.bf16.msra.mxu0 0
        %451 = vmatprep.subr.bf16.mxu0 0
        %452 = vmatpush1.bf16.msra.mxu0 0
        %453 = vmatprep.subr.bf16.mxu0 0
        %454 = vmatpush1.bf16.msra.mxu0 0
        %455 = vmatprep.subr.bf16.mxu0 0
        %456 = vmatpush1.bf16.msra.mxu0 0
        %457 = vmatprep.subr.bf16.mxu0 0
        %458 = vmatpush1.bf16.msra.mxu0 0
        %459 = vmatprep.subr.bf16.mxu0 0
        %460 = vmatpush1.bf16.msra.mxu0 0
        %461 = vmatprep.subr.bf16.mxu0 0
        %462 = vmatpush1.bf16.msra.mxu0 %v437
        %463 = vmatprep.subr.bf16.mxu0 0
        %464 = vmatpush2.bf16.msra.mxu0 0
        %465 = vmatprep.subr.bf16.mxu0 0
        %466 = vmatpush2.bf16.msra.mxu0 0
        %467 = vmatprep.subr.bf16.mxu0 0
        %468 = vmatpush2.bf16.msra.mxu0 0
        %469 = vmatprep.subr.bf16.mxu0 0
        %470 = vmatpush2.bf16.msra.mxu0 0
        %471 = vmatprep.subr.bf16.mxu0 0
        %472 = vmatpush2.bf16.msra.mxu0 0
        %473 = vmatprep.subr.bf16.mxu0 0
        %474 = vmatpush2.bf16.msra.mxu0 0
        %475 = vmatprep.subr.bf16.mxu0 0
        %476 = vmatpush2.bf16.msra.mxu0 0
        %477 = vmatprep.subr.bf16.mxu0 0
        %478 = vmatpush2.bf16.msra.mxu0 0
        %479 = vmatprep.mubr.bf16.mxu0 0
        %480 = vmatmul.mubr.bf16.gmra.mxu0 %v445
        %v481 = vpop.f32.mrf.mxu0
        %v482 = vadd.f32 0.0, %v481
        %v483 = vpop.f32.mrf.mxu0
        %v484 = vpop.f32.mrf.mxu0
        %v485 = vadd.f32 0.0, %v484
        %v486 = vpop.f32.mrf.mxu0
        %487 = vdwg.mxu0
        %v488 = vpack.c.bf16 %v485, %v482
        %v505 = vunpack.c.l.b16 %v252
        %v506 = vunpack.c.l.b16 %v253
        %v507 = vunpack.c.l.b16 %v254
        %v508 = vunpack.c.l.b16 %v255
        %v509 = vunpack.c.l.b16 %v256
        %v510 = vunpack.c.l.b16 %v257
        %v511 = vunpack.c.l.b16 %v258
        %v512 = vunpack.c.l.b16 %v259
        %v513 = vunpack.c.l.b16 %v260
        %v514 = vunpack.c.l.b16 %v261
        %v515 = vunpack.c.l.b16 %v262
        %v516 = vunpack.c.l.b16 %v263
        %v517 = vunpack.c.l.b16 %v264
        %v518 = vunpack.c.l.b16 %v265
        %v519 = vunpack.c.l.b16 %v266
        %v520 = vunpack.c.l.b16 %v267
        %v521 = vpack.c.b16 %v506, %v505
        %v522 = vpack.c.b16 %v508, %v507
        %v523 = vpack.c.b16 %v510, %v509
        %v524 = vpack.c.b16 %v512, %v511
        %v525 = vpack.c.b16 %v514, %v513
        %v526 = vpack.c.b16 %v516, %v515
        %v527 = vpack.c.b16 %v518, %v517
        %v528 = vpack.c.b16 %v520, %v519
        %v553 = vunpack.c.l.b16 %v268
        %v554 = vunpack.c.l.b16 %v269
        %v555 = vunpack.c.l.b16 %v270
        %v556 = vunpack.c.l.b16 %v271
        %v557 = vunpack.c.l.b16 %v272
        %v558 = vunpack.c.l.b16 %v273
        %v559 = vunpack.c.l.b16 %v274
        %v560 = vunpack.c.l.b16 %v275
        %v561 = vunpack.c.l.b16 %v276
        %v562 = vunpack.c.l.b16 %v277
        %v563 = vunpack.c.l.b16 %v278
        %v564 = vunpack.c.l.b16 %v279
        %v565 = vunpack.c.l.b16 %v280
        %v566 = vunpack.c.l.b16 %v281
        %v567 = vunpack.c.l.b16 %v282
        %v568 = vunpack.c.l.b16 %v283
        %v569 = vpack.c.b16 %v554, %v553
        %v570 = vpack.c.b16 %v556, %v555
        %v571 = vpack.c.b16 %v558, %v557
        %v572 = vpack.c.b16 %v560, %v559
        %v573 = vpack.c.b16 %v562, %v561
        %v574 = vpack.c.b16 %v564, %v563
        %v575 = vpack.c.b16 %v566, %v565
        %v576 = vpack.c.b16 %v568, %v567
        %v585 = vlaneseq
        %v586 = vshrl.u32 %v585, 7
        %v587 = vsub.s32 0, %v586
        %v588 = vrot.slane %v333, %v587
        %589 = vmatprep.subr.bf16.mxu0 0
        %590 = vmatpush1.bf16.msra.mxu0 %v528
        %591 = vmatprep.subr.bf16.mxu0 0
        %592 = vmatpush1.bf16.msra.mxu0 %v527
        %593 = vmatprep.subr.bf16.mxu0 0
        %594 = vmatpush1.bf16.msra.mxu0 %v526
        %595 = vmatprep.subr.bf16.mxu0 0
        %596 = vmatpush1.bf16.msra.mxu0 %v525
        %597 = vmatprep.subr.bf16.mxu0 0
        %598 = vmatpush1.bf16.msra.mxu0 %v524
        %599 = vmatprep.subr.bf16.mxu0 0
        %600 = vmatpush1.bf16.msra.mxu0 %v523
        %601 = vmatprep.subr.bf16.mxu0 0
        %602 = vmatpush1.bf16.msra.mxu0 %v522
        %603 = vmatprep.subr.bf16.mxu0 0
        %604 = vmatpush1.bf16.msra.mxu0 %v521
        %605 = vmatprep.subr.bf16.mxu0 0
        %606 = vmatpush2.bf16.msra.mxu0 %v576
        %607 = vmatprep.subr.bf16.mxu0 0
        %608 = vmatpush2.bf16.msra.mxu0 %v575
        %609 = vmatprep.subr.bf16.mxu0 0
        %610 = vmatpush2.bf16.msra.mxu0 %v574
        %611 = vmatprep.subr.bf16.mxu0 0
        %612 = vmatpush2.bf16.msra.mxu0 %v573
        %613 = vmatprep.subr.bf16.mxu0 0
        %614 = vmatpush2.bf16.msra.mxu0 %v572
        %615 = vmatprep.subr.bf16.mxu0 0
        %616 = vmatpush2.bf16.msra.mxu0 %v571
        %617 = vmatprep.subr.bf16.mxu0 0
        %618 = vmatpush2.bf16.msra.mxu0 %v570
        %619 = vmatprep.subr.bf16.mxu0 0
        %620 = vmatpush2.bf16.msra.mxu0 %v569
        %621 = vmatprep.mubr.bf16.mxu0 %v488
        %622 = vmatmul.mubr.bf16.gmra.mxu0 %v437
        %v623 = vpop.f32.mrf.mxu0
        %v624 = vadd.f32 %v588, %v623
        %v625 = vpop.f32.mrf.mxu0
        %v626 = vpop.f32.mrf.mxu0
        %v627 = vadd.f32 %v588, %v626
        %v628 = vpop.f32.mrf.mxu0
        %629 = vdwg.mxu0
        %v630 = vmax.f32 %v624, 0.0
        %v631 = vmax.f32 %v627, 0.0
        %v632 = vpack.c.bf16 %v631, %v630
        %633 = vmatprep.subr.bf16.mxu0 0
        %634 = vmatpush1.bf16.msra.mxu0 0
        %635 = vmatprep.subr.bf16.mxu0 0
        %636 = vmatpush1.bf16.msra.mxu0 0
        %637 = vmatprep.subr.bf16.mxu0 0
        %638 = vmatpush1.bf16.msra.mxu0 0
        %639 = vmatprep.subr.bf16.mxu0 0
        %640 = vmatpush1.bf16.msra.mxu0 0
        %641 = vmatprep.subr.bf16.mxu0 0
        %642 = vmatpush1.bf16.msra.mxu0 0
        %643 = vmatprep.subr.bf16.mxu0 0
        %644 = vmatpush1.bf16.msra.mxu0 0
        %645 = vmatprep.subr.bf16.mxu0 0
        %646 = vmatpush1.bf16.msra.mxu0 0
        %647 = vmatprep.subr.bf16.mxu0 0
        %648 = vmatpush1.bf16.msra.mxu0 %v632
        %649 = vmatprep.subr.bf16.mxu0 0
        %650 = vmatpush2.bf16.msra.mxu0 0
        %651 = vmatprep.subr.bf16.mxu0 0
        %652 = vmatpush2.bf16.msra.mxu0 0
        %653 = vmatprep.subr.bf16.mxu0 0
        %654 = vmatpush2.bf16.msra.mxu0 0
        %655 = vmatprep.subr.bf16.mxu0 0
        %656 = vmatpush2.bf16.msra.mxu0 0
        %657 = vmatprep.subr.bf16.mxu0 0
        %658 = vmatpush2.bf16.msra.mxu0 0
        %659 = vmatprep.subr.bf16.mxu0 0
        %660 = vmatpush2.bf16.msra.mxu0 0
        %661 = vmatprep.subr.bf16.mxu0 0
        %662 = vmatpush2.bf16.msra.mxu0 0
        %663 = vmatprep.subr.bf16.mxu0 0
        %664 = vmatpush2.bf16.msra.mxu0 0
        %665 = vmatprep.mubr.bf16.mxu0 0
        %666 = vmatmul.mubr.bf16.gmra.mxu0 %v445
        %v667 = vpop.f32.mrf.mxu0
        %v668 = vadd.f32 0.0, %v667
        %v669 = vpop.f32.mrf.mxu0
        %v670 = vpop.f32.mrf.mxu0
        %v671 = vadd.f32 0.0, %v670
        %v672 = vpop.f32.mrf.mxu0
        %673 = vdwg.mxu0
        %v674 = vpack.c.bf16 %v671, %v668
        %v691 = vunpack.c.l.b16 %v284
        %v692 = vunpack.c.l.b16 %v285
        %v693 = vunpack.c.l.b16 %v286
        %v694 = vunpack.c.l.b16 %v287
        %v695 = vunpack.c.l.b16 %v288
        %v696 = vunpack.c.l.b16 %v289
        %v697 = vunpack.c.l.b16 %v290
        %v698 = vunpack.c.l.b16 %v291
        %v699 = vunpack.c.l.b16 %v292
        %v700 = vunpack.c.l.b16 %v293
        %v701 = vunpack.c.l.b16 %v294
        %v702 = vunpack.c.l.b16 %v295
        %v703 = vunpack.c.l.b16 %v296
        %v704 = vunpack.c.l.b16 %v297
        %v705 = vunpack.c.l.b16 %v298
        %v706 = vunpack.c.l.b16 %v299
        %v707 = vpack.c.b16 %v692, %v691
        %v708 = vpack.c.b16 %v694, %v693
        %v709 = vpack.c.b16 %v696, %v695
        %v710 = vpack.c.b16 %v698, %v697
        %v711 = vpack.c.b16 %v700, %v699
        %v712 = vpack.c.b16 %v702, %v701
        %v713 = vpack.c.b16 %v704, %v703
        %v714 = vpack.c.b16 %v706, %v705
        %v739 = vunpack.c.l.b16 %v300
        %v740 = vunpack.c.l.b16 %v301
        %v741 = vunpack.c.l.b16 %v302
        %v742 = vunpack.c.l.b16 %v303
        %v743 = vunpack.c.l.b16 %v304
        %v744 = vunpack.c.l.b16 %v305
        %v745 = vunpack.c.l.b16 %v306
        %v746 = vunpack.c.l.b16 %v307
        %v747 = vunpack.c.l.b16 %v308
        %v748 = vunpack.c.l.b16 %v309
        %v749 = vunpack.c.l.b16 %v310
        %v750 = vunpack.c.l.b16 %v311
        %v751 = vunpack.c.l.b16 %v312
        %v752 = vunpack.c.l.b16 %v313
        %v753 = vunpack.c.l.b16 %v314
        %v754 = vunpack.c.l.b16 %v315
        %v755 = vpack.c.b16 %v740, %v739
        %v756 = vpack.c.b16 %v742, %v741
        %v757 = vpack.c.b16 %v744, %v743
        %v758 = vpack.c.b16 %v746, %v745
        %v759 = vpack.c.b16 %v748, %v747
        %v760 = vpack.c.b16 %v750, %v749
        %v761 = vpack.c.b16 %v752, %v751
        %v762 = vpack.c.b16 %v754, %v753
        %v771 = vlaneseq
        %v772 = vshrl.u32 %v771, 7
        %v773 = vsub.s32 0, %v772
        %v774 = vrot.slane %v334, %v773
        %775 = vmatprep.subr.bf16.mxu0 0
        %776 = vmatpush1.bf16.msra.mxu0 %v714
        %777 = vmatprep.subr.bf16.mxu0 0
        %778 = vmatpush1.bf16.msra.mxu0 %v713
        %779 = vmatprep.subr.bf16.mxu0 0
        %780 = vmatpush1.bf16.msra.mxu0 %v712
        %781 = vmatprep.subr.bf16.mxu0 0
        %782 = vmatpush1.bf16.msra.mxu0 %v711
        %783 = vmatprep.subr.bf16.mxu0 0
        %784 = vmatpush1.bf16.msra.mxu0 %v710
        %785 = vmatprep.subr.bf16.mxu0 0
        %786 = vmatpush1.bf16.msra.mxu0 %v709
        %787 = vmatprep.subr.bf16.mxu0 0
        %788 = vmatpush1.bf16.msra.mxu0 %v708
        %789 = vmatprep.subr.bf16.mxu0 0
        %790 = vmatpush1.bf16.msra.mxu0 %v707
        %791 = vmatprep.subr.bf16.mxu0 0
        %792 = vmatpush2.bf16.msra.mxu0 %v762
        %793 = vmatprep.subr.bf16.mxu0 0
        %794 = vmatpush2.bf16.msra.mxu0 %v761
        %795 = vmatprep.subr.bf16.mxu0 0
        %796 = vmatpush2.bf16.msra.mxu0 %v760
        %797 = vmatprep.subr.bf16.mxu0 0
        %798 = vmatpush2.bf16.msra.mxu0 %v759
        %799 = vmatprep.subr.bf16.mxu0 0
        %800 = vmatpush2.bf16.msra.mxu0 %v758
        %801 = vmatprep.subr.bf16.mxu0 0
        %802 = vmatpush2.bf16.msra.mxu0 %v757
        %803 = vmatprep.subr.bf16.mxu0 0
        %804 = vmatpush2.bf16.msra.mxu0 %v756
        %805 = vmatprep.subr.bf16.mxu0 0
        %806 = vmatpush2.bf16.msra.mxu0 %v755
        %807 = vmatprep.mubr.bf16.mxu0 %v674
        %808 = vmatmul.mubr.bf16.gmra.mxu0 %v632
        %v809 = vpop.f32.mrf.mxu0
        %v810 = vadd.f32 %v774, %v809
        %v811 = vpop.f32.mrf.mxu0
        %v812 = vpop.f32.mrf.mxu0
        %v813 = vadd.f32 %v774, %v812
        %v814 = vpop.f32.mrf.mxu0
        %815 = vdwg.mxu0
        %v816 = vmax.f32 %v810, 0.0
        %v817 = vmax.f32 %v813, 0.0
        %v818 = vpack.c.bf16 %v817, %v816
        %v819 = vlaneseq
        %v820 = vshrl.u32 %v819, 7
        %v821 = vsub.s32 0, %v820
        %v822 = vrot.slane %v335, %v821
        %v839 = vunpack.c.l.b16 %v316
        %v840 = vunpack.c.l.b16 %v317
        %v841 = vunpack.c.l.b16 %v318
        %v842 = vunpack.c.l.b16 %v319
        %v843 = vunpack.c.l.b16 %v320
        %v844 = vunpack.c.l.b16 %v321
        %v845 = vunpack.c.l.b16 %v322
        %v846 = vunpack.c.l.b16 %v323
        %v847 = vunpack.c.l.b16 %v324
        %v848 = vunpack.c.l.b16 %v325
        %v849 = vunpack.c.l.b16 %v326
        %v850 = vunpack.c.l.b16 %v327
        %v851 = vunpack.c.l.b16 %v328
        %v852 = vunpack.c.l.b16 %v329
        %v853 = vunpack.c.l.b16 %v330
        %v854 = vunpack.c.l.b16 %v331
        %v855 = vpack.c.b16 %v840, %v839
        %v856 = vpack.c.b16 %v842, %v841
        %v857 = vpack.c.b16 %v844, %v843
        %v858 = vpack.c.b16 %v846, %v845
        %v859 = vpack.c.b16 %v848, %v847
        %v860 = vpack.c.b16 %v850, %v849
        %v861 = vpack.c.b16 %v852, %v851
        %v862 = vpack.c.b16 %v854, %v853
        %871 = vmatprep.subr.bf16.mxu0 0
        %872 = vmatpush1.bf16.msra.mxu0 %v862
        %873 = vmatprep.subr.bf16.mxu0 0
        %874 = vmatpush1.bf16.msra.mxu0 %v861
        %875 = vmatprep.subr.bf16.mxu0 0
        %876 = vmatpush1.bf16.msra.mxu0 %v860
        %877 = vmatprep.subr.bf16.mxu0 0
        %878 = vmatpush1.bf16.msra.mxu0 %v859
        %879 = vmatprep.subr.bf16.mxu0 0
        %880 = vmatpush1.bf16.msra.mxu0 %v858
        %881 = vmatprep.subr.bf16.mxu0 0
        %882 = vmatpush1.bf16.msra.mxu0 %v857
        %883 = vmatprep.subr.bf16.mxu0 0
        %884 = vmatpush1.bf16.msra.mxu0 %v856
        %885 = vmatprep.subr.bf16.mxu0 0
        %886 = vmatpush1.bf16.msra.mxu0 %v855
        %887 = vmatprep.subr.bf16.mxu0 0
        %888 = vmatpush2.bf16.msra.mxu0 0
        %889 = vmatprep.subr.bf16.mxu0 0
        %890 = vmatpush2.bf16.msra.mxu0 0
        %891 = vmatprep.subr.bf16.mxu0 0
        %892 = vmatpush2.bf16.msra.mxu0 0
        %893 = vmatprep.subr.bf16.mxu0 0
        %894 = vmatpush2.bf16.msra.mxu0 0
        %895 = vmatprep.subr.bf16.mxu0 0
        %896 = vmatpush2.bf16.msra.mxu0 0
        %897 = vmatprep.subr.bf16.mxu0 0
        %898 = vmatpush2.bf16.msra.mxu0 0
        %899 = vmatprep.subr.bf16.mxu0 0
        %900 = vmatpush2.bf16.msra.mxu0 0
        %901 = vmatprep.subr.bf16.mxu0 0
        %902 = vmatpush2.bf16.msra.mxu0 0
        %903 = vmatprep.mubr.bf16.mxu0 0
        %904 = vmatmul.mubr.bf16.gmra.mxu0 %v818
        %v905 = vpop.f32.mrf.mxu0
        %v906 = vadd.f32 %v822, %v905
        %v907 = vpop.f32.mrf.mxu0
        %v908 = vpop.f32.mrf.mxu0
        %v909 = vadd.f32 %v822, %v908
        %v910 = vpop.f32.mrf.mxu0
        %911 = vdwg.mxu0
        %912 = vmax.xlane.f32.xlu0 %v906
        %v913 = vpop.xlane.xlu0 %912
        %914 = vmax.xlane.f32.xlu0 %v909
        %v915 = vpop.xlane.xlu0 %914
        %v916 = vsub.f32 %v906, %v913
        %v917 = vsub.f32 %v909, %v915
        %v918 = vmul.f32 %v916, 1.442695
        %v919 = vpow.pop %v918
        %v920 = vmul.f32 %v917, 1.442695
        %v921 = vpow.pop %v920
        %922 = vadd.xlane.f32.xlu0 %v919
        %v923 = vpop.xlane.xlu0 %922
        %924 = vadd.xlane.f32.xlu0 %v921
        %v925 = vpop.xlane.xlu0 %924
        %v926 = vlog2.pop %v923
        %v927 = vmul.f32 %v926, 0.6931472
        %v928 = vlog2.pop %v925
        %v929 = vmul.f32 %v928, 0.6931472
        %v930 = vsub.f32 %v916, %v927
        %v931 = vsub.f32 %v917, %v929
        %932 = vst [vmem:[%s220] sm:$0xff] %v930
        %933 = vst [vmem:[%s220 + $0x8] sm:$0xff] %v931
        %s934 = sand.u32 %s121, 1
        %s935 = scalar_lea.sflag [#allocation4], %s934
        %s936 = sand.u32 %s121, 1
        %s937 = smul.addr %s936, 16
        %s938 = scalar_lea.vmem [#allocation5], %s937
        // Predicated region
        $region41: #{forward.1} parent=35 // pred_check
          %p939 = pneg %p131
        $region42: #{forward.1} parent=35 // pred_check_branch
          %941 = sbr.rel (%p939) target = $region44
        $region43: #{forward.1} parent=35 // pred_region
          %s943 = ssub.s32 256, 256
          %944 = vsyncadd %s935, %s943
          %s945 = smul.addr %s19, 2
          %s946 = smul.addr %s945, 128
          %s947 = scalar_lea.hbm %s4, %s946
          %s948 = sshll.u32 %s938, 4
          %s949 = int_to_ptr.vmem [resolvable:$true] %s948
          %954 = dma.vmem_to_hbm [thread:$0]  %s949, 256, %s947, %s935, 128, 128, 8
        $region44: #{forward.1} parent=35 // pred_fallthru
          _
      $region36: #{forward.1} parent=5 // pred_fallthru
        _
      %p955 = scmp.le.s32.totalorder 2, %s14
      // Predicated region
      $region45: #{forward.1} parent=5 // pred_check
        %p956 = pneg %p955
      $region46: #{forward.1} parent=5 // pred_check_branch
        %958 = sbr.rel (%p956) target = $region48
      $region47: #{forward.1} parent=5 // pred_region
        %s959 = ssub.s32 %s14, 2
        // Predicated region
        $region49: #{forward.1} parent=47 // pred_check
          %p960 = pneg %p137
        $region50: #{forward.1} parent=47 // pred_check_branch
          %962 = sbr.rel (%p960) target = $region52
        $region51: #{forward.1} parent=47 // pred_region
          %s963 = sand.u32 %s122, 1
          %s964 = scalar_lea.sflag [#allocation4], %s963
          %s965 = sand.u32 %s122, 1
          %s966 = smul.addr %s965, 16
          %s967 = scalar_lea.vmem [#allocation5], %s966
          %968 = dma.done %s964, 256
        $region52: #{forward.1} parent=47 // pred_fallthru
          _
      $region48: #{forward.1} parent=5 // pred_fallthru
        _
    $region6: #{forward.1} parent=1 // loop_footer
      %s18 = sadd.s32 1, %s14
    $region7: #{forward.1} parent=1 // loop_footer_branch
      %13 = sbr.rel target = $region3
    $region8: #{forward.1} parent=1 // loop_exit
      _
    %969 = vsyncpa [#allocation3], 1
    %s970 = scalar_lea.sflag [#allocation3], 1
    %971 = vsyncpa %s970, 1
    %972 = vsyncpa [#allocation4], 1
    %s973 = scalar_lea.sflag [#allocation4], 1
    %974 = vsyncpa %s973, 1

</llo_original>
